<compile_context>
chip_gen: v5e
topology: v5e:2x2
jax: 0.10.0
libtpu: 0.0.40
codegen_flags: <defaults>
</compile_context>

<pallas_src>
import jax
import jax.numpy as jnp
from jax.experimental import pallas as pl
from jax.experimental.pallas import tpu as pltpu


# ----------------------------------------------------------------------------- kernels

def _ffn_kernel_acc(x_ref, w1_ref, b1_ref, w2_ref, b2_ref, o_ref, acc_ref):
    """Grid step of relu(x@W1+b1)@W2 + b2 with a separate f32 accumulator (non-f32 out)."""
    f = pl.program_id(1)

    @pl.when(f == 0)
    def _():
        acc_ref[...] = jnp.zeros_like(acc_ref)

    # First matmul (tm x D) @ (D x tf) on the MXU (bf16 in, f32 acc), bias+ReLU on the VPU.
    h = jnp.dot(x_ref[...], w1_ref[...], preferred_element_type=jnp.float32)
    h = jnp.maximum(h + b1_ref[...], 0.0)

    # Second matmul: this d_ff tile's contribution, bf16 on the MXU, f32 accumulation.
    acc_ref[...] += jnp.dot(h.astype(jnp.bfloat16), w2_ref[...],
                            preferred_element_type=jnp.float32)

    @pl.when(f == pl.num_programs(1) - 1)
    def _():
        o_ref[...] = (acc_ref[...] + b2_ref[...]).astype(o_ref.dtype)


def _ffn_kernel_f32_out(x_ref, w1_ref, b1_ref, w2_ref, b2_ref, o_ref):
    """Same as above but accumulates directly into the (f32, f-resident) output block."""
    f = pl.program_id(1)

    @pl.when(f == 0)
    def _():
        o_ref[...] = jnp.zeros_like(o_ref)

    h = jnp.dot(x_ref[...], w1_ref[...], preferred_element_type=jnp.float32)
    h = jnp.maximum(h + b1_ref[...], 0.0)
    o_ref[...] += jnp.dot(h.astype(jnp.bfloat16), w2_ref[...],
                          preferred_element_type=jnp.float32)

    @pl.when(f == pl.num_programs(1) - 1)
    def _():
        o_ref[...] = o_ref[...] + b2_ref[...]


# ---------------------------------------------------------------------- tile selection

def _cdiv(a: int, b: int) -> int:
    return -(-a // b)


def _round_up(n: int, m: int) -> int:
    return _cdiv(n, m) * m


def _tpu_vmem_and_cores():
    """(VMEM bytes, #TensorCores) — conservative 64 MiB / 1 core fallback (v7x-safe)."""
    try:
        info = pltpu.get_tpu_info()
        vmem = int(getattr(info, "vmem_capacity_bytes", 0) or (64 << 20))
        cores = int(getattr(info, "num_cores", 1) or 1)
        return vmem, max(cores, 1)
    except Exception:
        return 64 << 20, 1


def _pick_tiles(M: int, F: int, D: int, out_bytes: int, vmem_cap: int, num_cores: int):
    """Pick (tm, tf, M_pad, F_pad, footprint) sized to the chip's VMEM."""
    ROW_ALIGN = 16        # bf16 packs 2 rows per sublane -> keep row tiles %16
    LANE = 128

    budget = int(0.70 * vmem_cap)
    # v5e/v6e (128 MiB VMEM) afford a bigger row tile than v7x (64 MiB).
    tm_cap = 512 if vmem_cap >= (96 << 20) else 256
    tf_cap = 512

    def footprint(tm, tf):
        return (2 * tm * D * 2              # x tile, bf16, double-buffered
                + 4 * D * tf * 2            # W1 + W2 tiles, bf16, double-buffered
                + 2 * tm * D * out_bytes    # output tile, double-buffered
                + tm * D * 4                # f32 accumulator (scratch or f32 out)
                + 2 * (tf + D) * 4)         # biases (f32)

    # Rows: pad to bf16 packing, split as evenly as possible into <= tm_cap tiles.
    M_pad = _round_up(M, ROW_ALIGN)
    n_row = _cdiv(M_pad, tm_cap)
    if num_cores >= 2 and M_pad >= num_cores * ROW_ALIGN:
        n_row = _round_up(n_row, num_cores)   # keep every TensorCore busy (v7x)
    tm = _round_up(_cdiv(M_pad, n_row), ROW_ALIGN)

    # Hidden dim: 128-aligned, shrink until the tile footprint fits the VMEM budget.
    tf = min(_round_up(F, LANE), tf_cap)
    while tf > LANE and footprint(tm, tf) > budget:
        tf -= LANE
    while tm > ROW_ALIGN and footprint(tm, tf) > budget:
        tm -= ROW_ALIGN

    M_pad = _round_up(M_pad, tm)
    F_pad = _round_up(F, tf)
    return tm, tf, M_pad, F_pad, footprint(tm, tf)


# ----------------------------------------------------------------------------- wrapper

def feed_forward(x: jnp.ndarray,
                 w1: jnp.ndarray, b1: jnp.ndarray,
                 w2: jnp.ndarray, b2: jnp.ndarray) -> jnp.ndarray:
    """FFN forward.  x: (B, L, D); w1: (D, F); b1: (F,); w2: (F, D); b2: (D,).

    Equivalent to PyTorch linear2(relu(linear1(x))) with w1 = linear1.weight.T, etc.
    Dropout is identity at inference; `checkpoint` does not change the forward math.
    Compute runs bf16 on the MXU with f32 accumulation.
    """
    B, L, D = x.shape
    F = w1.shape[1]
    M = B * L
    out_dtype = x.dtype
    out_bytes = jnp.dtype(out_dtype).itemsize

    vmem_cap, num_cores = _tpu_vmem_and_cores()
    tm, tf, M_pad, F_pad, fp = _pick_tiles(M, F, D, out_bytes, vmem_cap, num_cores)

    # Lane-dense 2-D problem; bf16 for the MXU, f32 biases for the epilogue.
    x2 = x.reshape(M, D).astype(jnp.bfloat16)
    w1c = w1.astype(jnp.bfloat16)
    w2c = w2.astype(jnp.bfloat16)
    b1_2 = b1.reshape(1, F).astype(jnp.float32)
    b2_2 = b2.reshape(1, D).astype(jnp.float32)

    # Zero-padding: padded hidden columns give relu(0 + 0) = 0 -> contribute nothing;
    # padded rows are sliced off below.
    if M_pad != M:
        x2 = jnp.pad(x2, ((0, M_pad - M), (0, 0)))
    if F_pad != F:
        w1c = jnp.pad(w1c, ((0, 0), (0, F_pad - F)))
        b1_2 = jnp.pad(b1_2, ((0, 0), (0, F_pad - F)))
        w2c = jnp.pad(w2c, ((0, F_pad - F), (0, 0)))

    grid = (M_pad // tm, F_pad // tf)
    n_row_tiles = grid[0]

    # Advisory cost estimate so XLA can overlap this call with surrounding ops.
    cost = pl.CostEstimate(
        flops=4 * M_pad * D * F_pad,
        transcendentals=0,
        bytes_accessed=(M_pad * D * 2                        # x in (bf16)
                        + n_row_tiles * 2 * D * F_pad * 2    # W1 + W2 restreamed per row tile
                        + M_pad * D * out_bytes              # output
                        + (F_pad + D) * 4),                  # biases
    )

    vmem_limit = int(min(vmem_cap, max(2 * fp + (4 << 20), 32 << 20)))
    compiler_params = pltpu.CompilerParams(
        dimension_semantics=("parallel", "arbitrary"),
        vmem_limit_bytes=vmem_limit,
    )

    in_specs = [
        pl.BlockSpec((tm, D), lambda i, f: (i, 0)),   # x row tile (resident across f)
        pl.BlockSpec((D, tf), lambda i, f: (0, f)),   # W1 column tile
        pl.BlockSpec((1, tf), lambda i, f: (0, f)),   # b1 tile
        pl.BlockSpec((tf, D), lambda i, f: (f, 0)),   # W2 row tile
        pl.BlockSpec((1, D), lambda i, f: (0, 0)),    # b2 (resident)
    ]
    out_spec = pl.BlockSpec((tm, D), lambda i, f: (i, 0))

    if out_dtype == jnp.float32:
        # Accumulate directly into the f-resident f32 output block (saves tm*D*4 of VMEM).
        out2 = pl.pallas_call(
            _ffn_kernel_f32_out,
            out_shape=jax.ShapeDtypeStruct((M_pad, D), jnp.float32),
            grid=grid,
            in_specs=in_specs,
            out_specs=out_spec,
            compiler_params=compiler_params,
            cost_estimate=cost,
        )(x2, w1c, b1_2, w2c, b2_2)
    else:
        out2 = pl.pallas_call(
            _ffn_kernel_acc,
            out_shape=jax.ShapeDtypeStruct((M_pad, D), out_dtype),
            grid=grid,
            in_specs=in_specs,
            out_specs=out_spec,
            scratch_shapes=[pltpu.VMEM((tm, D), jnp.float32)],
            compiler_params=compiler_params,
            cost_estimate=cost,
        )(x2, w1c, b1_2, w2c, b2_2)

    if M_pad != M:
        out2 = out2[:M]
    return out2.reshape(B, L, D)


# TODO(synk): training-mode dropout (stochastic masking via pltpu.prng_*) is not
# implemented; the kernel matches the module's eval/inference forward where both
# dropouts are the identity and `checkpoint` has no effect on forward math.
# TODO(synk): optional fp8 weight quantization for v7x (halves weight DMA) not implemented.


if __name__ == "__main__":
    # Small shapes consistent with the module: (batch, seq_len, d_model), d_ff = 2*d_model.
    B, L, D, Dff = 2, 8, 32, 64

    key = jax.random.PRNGKey(0)
    kx, kw1, kb1, kw2, kb2 = jax.random.split(key, 5)

    x = jax.random.normal(kx, (B, L, D), dtype=jnp.float32)
    w1 = jax.random.normal(kw1, (D, Dff), dtype=jnp.float32) * 0.1   # linear1.weight.T
    b1 = jax.random.normal(kb1, (Dff,), dtype=jnp.float32) * 0.1     # linear1.bias
    w2 = jax.random.normal(kw2, (Dff, D), dtype=jnp.float32) * 0.1   # linear2.weight.T
    b2 = jax.random.normal(kb2, (D,), dtype=jnp.float32) * 0.1       # linear2.bias

    out = feed_forward(x, w1, b1, w2, b2)
    out = jax.block_until_ready(out)
    assert out.shape == (B, L, D)

    # Mixed-precision reference matching the kernel's compute dtype (bf16 MXU, f32 acc).
    x2 = x.reshape(B * L, D)
    h_ref = jnp.maximum(
        jnp.dot(x2.astype(jnp.bfloat16), w1.astype(jnp.bfloat16),
                preferred_element_type=jnp.float32) + b1, 0.0)
    ref_bf16 = (jnp.dot(h_ref.astype(jnp.bfloat16), w2.astype(jnp.bfloat16),
                        preferred_element_type=jnp.float32) + b2).reshape(B, L, D)
    assert jnp.allclose(out, ref_bf16, atol=2e-2, rtol=2e-2), "mismatch vs bf16 reference"

    # Full-precision reference (PyTorch eval forward); loose tolerance for bf16 MXU math.
    ref_f32 = (jnp.maximum(x2 @ w1 + b1, 0.0) @ w2 + b2).reshape(B, L, D)
    assert jnp.allclose(out, ref_f32, atol=5e-2, rtol=5e-2), "mismatch vs f32 reference"

    print("KERNEL_OK")
</pallas_src>

<mosaic_0001>
module attributes {stable_mosaic.version = 11 : i64} {
  func.func @_ffn_kernel_f32_out(%arg0: i32, %arg1: i32, %arg2: memref<16x32xbf16, #tpu.memory_space<vmem>>, %arg3: memref<32x128xbf16, #tpu.memory_space<vmem>>, %arg4: memref<1x128xf32, #tpu.memory_space<vmem>>, %arg5: memref<128x32xbf16, #tpu.memory_space<vmem>>, %arg6: memref<1x32xf32, #tpu.memory_space<vmem>>, %arg7: memref<16x32xf32, #tpu.memory_space<vmem>>) attributes {dimension_semantics = [#tpu.dimension_semantics<parallel>, #tpu.dimension_semantics<arbitrary>], iteration_bounds = array<i64: 1, 1>, scalar_prefetch = 0 : i64, scratch_operands = 0 : i64, tpu.core_type = #tpu.core_type<tc>, window_params = [{transform_indices = @transform_0, window_bounds = array<i64: 16, 32>}, {transform_indices = @transform_1, window_bounds = array<i64: 32, 128>}, {transform_indices = @transform_2, window_bounds = array<i64: 1, 128>}, {transform_indices = @transform_3, window_bounds = array<i64: 128, 32>}, {pipeline_mode = #tpu.pipeline_mode<synchronous>, transform_indices = @transform_4, window_bounds = array<i64: 1, 32>}, {transform_indices = @transform_5, window_bounds = array<i64: 16, 32>}]} {
    %c0_i32 = arith.constant 0 : i32
    %0 = arith.cmpi eq, %arg1, %c0_i32 : i32
    %1 = arith.extui %0 : i1 to i32
    %c0_i32_0 = arith.constant 0 : i32
    %2 = arith.cmpi ne, %1, %c0_i32_0 : i32
    scf.if %2 {
      %cst_16 = arith.constant 0.000000e+00 : f32
      %20 = vector.broadcast %cst_16 : f32 to vector<16x32xf32>
      %c0_17 = arith.constant 0 : index
      %c0_18 = arith.constant 0 : index
      %21 = vector.load %arg7[%c0_17, %c0_18] : memref<16x32xf32, #tpu.memory_space<vmem>>, vector<16x32xf32>
      tpu.vector_store %arg7[%c0_17, %c0_18], %20 {strides = array<i32>} : memref<16x32xf32, #tpu.memory_space<vmem>>, vector<16x32xf32>,
    } else {
    }
    %c0 = arith.constant 0 : index
    %c0_1 = arith.constant 0 : index
    %3 = vector.load %arg2[%c0, %c0_1] : memref<16x32xbf16, #tpu.memory_space<vmem>>, vector<16x32xbf16>
    %c0_2 = arith.constant 0 : index
    %c0_3 = arith.constant 0 : index
    %4 = vector.load %arg3[%c0_2, %c0_3] : memref<32x128xbf16, #tpu.memory_space<vmem>>, vector<32x128xbf16>
    %cst = arith.constant dense<0.000000e+00> : vector<16x128xf32>
    %5 = tpu.matmul %3, %4, %cst {dimension_numbers = #tpu.dot_dimension_numbers<[1], [0], [0], [1], [0, 0, 1, 1], [], []>} : vector<16x32xbf16>, vector<32x128xbf16>, vector<16x128xf32> -> vector<16x128xf32>
    %c0_4 = arith.constant 0 : index
    %c0_5 = arith.constant 0 : index
    %6 = vector.load %arg4[%c0_4, %c0_5] : memref<1x128xf32, #tpu.memory_space<vmem>>, vector<1x128xf32>
    %7 = vector.broadcast %6 : vector<1x128xf32> to vector<16x128xf32>
    %8 = arith.addf %5, %7 : vector<16x128xf32>
    %cst_6 = arith.constant 0.000000e+00 : f32
    %9 = vector.broadcast %cst_6 : f32 to vector<16x128xf32>
    %10 = arith.maximumf %8, %9 : vector<16x128xf32>
    %c0_7 = arith.constant 0 : index
    %c0_8 = arith.constant 0 : index
    %11 = vector.load %arg7[%c0_7, %c0_8] : memref<16x32xf32, #tpu.memory_space<vmem>>, vector<16x32xf32>
    %12 = arith.truncf %10 : vector<16x128xf32> to vector<16x128xbf16>
    %c0_9 = arith.constant 0 : index
    %c0_10 = arith.constant 0 : index
    %13 = vector.load %arg5[%c0_9, %c0_10] : memref<128x32xbf16, #tpu.memory_space<vmem>>, vector<128x32xbf16>
    %cst_11 = arith.constant dense<0.000000e+00> : vector<16x32xf32>
    %14 = tpu.matmul %12, %13, %cst_11 {dimension_numbers = #tpu.dot_dimension_numbers<[1], [0], [0], [1], [0, 0, 1, 1], [], []>} : vector<16x128xbf16>, vector<128x32xbf16>, vector<16x32xf32> -> vector<16x32xf32>
    %15 = arith.addf %11, %14 : vector<16x32xf32>
    %c0_12 = arith.constant 0 : index
    %c0_13 = arith.constant 0 : index
    %16 = vector.load %arg7[%c0_12, %c0_13] : memref<16x32xf32, #tpu.memory_space<vmem>>, vector<16x32xf32>
    tpu.vector_store %arg7[%c0_12, %c0_13], %15 {strides = array<i32>} : memref<16x32xf32, #tpu.memory_space<vmem>>, vector<16x32xf32>,
    %c0_i32_14 = arith.constant 0 : i32
    %17 = arith.cmpi eq, %arg1, %c0_i32_14 : i32
    %18 = arith.extui %17 : i1 to i32
    %c0_i32_15 = arith.constant 0 : i32
    %19 = arith.cmpi ne, %18, %c0_i32_15 : i32
    scf.if %19 {
      %c0_16 = arith.constant 0 : index
      %c0_17 = arith.constant 0 : index
      %20 = vector.load %arg7[%c0_16, %c0_17] : memref<16x32xf32, #tpu.memory_space<vmem>>, vector<16x32xf32>
      %c0_18 = arith.constant 0 : index
      %c0_19 = arith.constant 0 : index
      %21 = vector.load %arg6[%c0_18, %c0_19] : memref<1x32xf32, #tpu.memory_space<vmem>>, vector<1x32xf32>
      %22 = vector.broadcast %21 : vector<1x32xf32> to vector<16x32xf32>
      %23 = arith.addf %20, %22 : vector<16x32xf32>
      %c0_20 = arith.constant 0 : index
      %c0_21 = arith.constant 0 : index
      %24 = vector.load %arg7[%c0_20, %c0_21] : memref<16x32xf32, #tpu.memory_space<vmem>>, vector<16x32xf32>
      tpu.vector_store %arg7[%c0_20, %c0_21], %23 {strides = array<i32>} : memref<16x32xf32, #tpu.memory_space<vmem>>, vector<16x32xf32>,
    } else {
    }
    return
  }
  func.func @transform_0(%arg0: i32, %arg1: i32) -> (i32, i32) {
    %c0_i32 = arith.constant 0 : i32
    %c0_i32_0 = arith.constant 0 : i32
    return %arg0, %c0_i32 : i32, i32
  }
  func.func @transform_1(%arg0: i32, %arg1: i32) -> (i32, i32) {
    %c0_i32 = arith.constant 0 : i32
    %c0_i32_0 = arith.constant 0 : i32
    return %c0_i32, %arg1 : i32, i32
  }
  func.func @transform_2(%arg0: i32, %arg1: i32) -> (i32, i32) {
    %c0_i32 = arith.constant 0 : i32
    %c0_i32_0 = arith.constant 0 : i32
    return %c0_i32, %arg1 : i32, i32
  }
  func.func @transform_3(%arg0: i32, %arg1: i32) -> (i32, i32) {
    %c0_i32 = arith.constant 0 : i32
    %c0_i32_0 = arith.constant 0 : i32
    return %arg1, %c0_i32 : i32, i32
  }
  func.func @transform_4(%arg0: i32, %arg1: i32) -> (i32, i32) {
    %c0_i32 = arith.constant 0 : i32
    %c0_i32_0 = arith.constant 0 : i32
    %c0_i32_1 = arith.constant 0 : i32
    return %c0_i32, %c0_i32_0 : i32, i32
  }
  func.func @transform_5(%arg0: i32, %arg1: i32) -> (i32, i32) {
    %c0_i32 = arith.constant 0 : i32
    %c0_i32_0 = arith.constant 0 : i32
    return %arg0, %c0_i32 : i32, i32
  }
}

</mosaic_0001>

<llo_original>
// kernel: tpu_custom_call.1
$region0: #{tpu_custom_call.1}
  #allocation0 [shape = 'u32[]', space=smem, size = 0x4, offset = 0x4, fixed_abs, tag = 'smem constant byte address 0x4 - core index']
  #allocation1 [shape = 'u32[72,128]{1,0:T(1,128)}', space=vmem, size = 0x9000, scoped, tag = 'internal scratch']
  %s0 = inlined_call_operand.vmem [shape: bf16[16,32], index: 0, kind: input, shape index: {}]
  %s1 = inlined_call_operand.vmem [shape: bf16[32,128], index: 1, kind: input, shape index: {}]
  %s2 = inlined_call_operand.vmem [shape: f32[1,128], index: 2, kind: input, shape index: {}]
  %s3 = inlined_call_operand.vmem [shape: bf16[128,32], index: 3, kind: input, shape index: {}]
  %s4 = inlined_call_operand.vmem [shape: f32[1,32], index: 4, kind: input, shape index: {}]
  %s5 = inlined_call_operand.hbm [shape: f32[16,32], index: 5, kind: output, shape index: {}]
  %s6 = sld [smem:[#allocation0]]
  $region38: #{tpu_custom_call.1} parent=0
    _
  %s8 = ssub.s32 1, %s6
  %s9 = scalar_select 0, %s8, %s6
  $region1: #{tpu_custom_call.1} parent=0
    #allocation2 [shape = 'u8[8192]{0}', space=vmem, size = 0x2000, scoped, tag = 'output window, operand 0, single buffered']
    #allocation3 [shape = 's32[1]{0}', space=sflag, size = 0x4, scoped, tag = 'scoped memory for tpu_custom_call.1']
    %10 = vsyncpa [#allocation3], 0
    // Predicated region
    $region2: #{tpu_custom_call.1} parent=1 // pred_check
      _
    $region3: #{tpu_custom_call.1} parent=1 // pred_check_branch
      %12 = sbr.rel (0) target = $region5
    $region4: #{tpu_custom_call.1} parent=1 // pred_region
      _
    $region5: #{tpu_custom_call.1} parent=1 // pred_fallthru
      _
    // Predicated region
    $region6: #{tpu_custom_call.1} parent=1 // pred_check
      _
    $region7: #{tpu_custom_call.1} parent=1 // pred_check_branch
      %14 = sbr.rel (0) target = $region9
    $region8: #{tpu_custom_call.1} parent=1 // pred_region
      _
    $region9: #{tpu_custom_call.1} parent=1 // pred_fallthru
      _
    // Predicated region
    $region10: #{tpu_custom_call.1} parent=1 // pred_check
      _
    $region11: #{tpu_custom_call.1} parent=1 // pred_check_branch
      %16 = sbr.rel (0) target = $region13
    $region12: #{tpu_custom_call.1} parent=1 // pred_region
      _
    $region13: #{tpu_custom_call.1} parent=1 // pred_fallthru
      _
    // Predicated region
    $region14: #{tpu_custom_call.1} parent=1 // pred_check
      _
    $region15: #{tpu_custom_call.1} parent=1 // pred_check_branch
      %18 = sbr.rel (0) target = $region17
    $region16: #{tpu_custom_call.1} parent=1 // pred_region
      _
    $region17: #{tpu_custom_call.1} parent=1 // pred_fallthru
      _
    // Predicated region
    $region18: #{tpu_custom_call.1} parent=1 // pred_check
      _
    $region19: #{tpu_custom_call.1} parent=1 // pred_check_branch
      %20 = sbr.rel (0) target = $region21
    $region20: #{tpu_custom_call.1} parent=1 // pred_region
      _
    $region21: #{tpu_custom_call.1} parent=1 // pred_fallthru
      _
    %p22 = scmp.eq.s32.totalorder 0, 0
    // Predicated region
    $region22: #{tpu_custom_call.1} parent=1 // pred_check
      %p23 = pneg %p22
    $region23: #{tpu_custom_call.1} parent=1 // pred_check_branch
      %25 = sbr.rel (%p23) target = $region25
    $region24: #{tpu_custom_call.1} parent=1 // pred_region
      %vm26 = vcmask 261120
      %27 = vst.msk [vmem:[#allocation2] sm:$0xff] %vm26, 0.0
      %28 = vst.msk [vmem:[#allocation2 + $0x8] sm:$0xff] %vm26, 0.0
    $region25: #{tpu_custom_call.1} parent=1 // pred_fallthru
      _
    %v29 = vld [vmem:[%s0] sm:$0xf]
    %v30 = vld [vmem:[%s0 + $0x4] sm:$0xf]
    %v31 = vld [vmem:[%s1] sm:$0xf]
    %v32 = vld [vmem:[%s1 + $0x4] sm:$0xf]
    %v33 = vld [vmem:[%s1 + $0x8] sm:$0xf]
    %v34 = vld [vmem:[%s1 + $0xc] sm:$0xf]
    %v35 = vld [vmem:[%s2] sm:$0x1]
    %v37 = vperm.slane %v35, 0
    %v41 = vunpack.c.l.b16 %v29
    %v42 = vunpack.c.l.b16 %v30
    %v43 = vpack.c.b16 %v42, %v41
    %v48 = vunpack.c.l.b16 %v31
    %v49 = vunpack.c.l.b16 %v32
    %v50 = vunpack.c.l.b16 %v33
    %v51 = vunpack.c.l.b16 %v34
    %v52 = vpack.c.b16 %v49, %v48
    %v53 = vpack.c.b16 %v51, %v50
    %vm56 = vcmask 261120
    %v58 = vsel %vm56, %v43, 0
    %60 = vmatpush.bf16.msra.mxu0 0
    %61 = vmatpush.bf16.msra.mxu0 0
    %62 = vmatpush.bf16.msra.mxu0 0
    %63 = vmatpush.bf16.msra.mxu0 0
    %64 = vmatpush.bf16.msra.mxu0 0
    %65 = vmatpush.bf16.msra.mxu0 0
    %66 = vmatpush.bf16.msra.mxu0 %v53
    %67 = vmatpush.bf16.msra.mxu0 %v52
    %68 = vmatmul.bf16.gmra.mxu0 %v58
    %v69 = vpop.f32.mrf.mxu0
    %v70 = vadd.f32 %v37, %v69
    %v71 = vpop.f32.mrf.mxu0
    %v72 = vadd.f32 %v37, %v71
    %73 = vdwg.mxu0
    %v74 = vmax.f32 %v70, 0.0
    %v75 = vmax.f32 %v72, 0.0
    %v76 = vld [vmem:[#allocation2] sm:$0xff]
    %v77 = vld [vmem:[#allocation2 + $0x8] sm:$0xff]
    %v78 = vpack.c.bf16 %v75, %v74
    %v79 = vld [vmem:[%s3] sm:$0xf]
    %v80 = vld [vmem:[%s3 + $0x4] sm:$0xf]
    %v81 = vld [vmem:[%s3 + $0x8] sm:$0xf]
    %v82 = vld [vmem:[%s3 + $0xc] sm:$0xf]
    %v83 = vld [vmem:[%s3 + $0x10] sm:$0xf]
    %v84 = vld [vmem:[%s3 + $0x14] sm:$0xf]
    %v85 = vld [vmem:[%s3 + $0x18] sm:$0xf]
    %v86 = vld [vmem:[%s3 + $0x1c] sm:$0xf]
    %v87 = vld [vmem:[%s3 + $0x20] sm:$0xf]
    %v88 = vld [vmem:[%s3 + $0x24] sm:$0xf]
    %v89 = vld [vmem:[%s3 + $0x28] sm:$0xf]
    %v90 = vld [vmem:[%s3 + $0x2c] sm:$0xf]
    %v91 = vld [vmem:[%s3 + $0x30] sm:$0xf]
    %v92 = vld [vmem:[%s3 + $0x34] sm:$0xf]
    %v93 = vld [vmem:[%s3 + $0x38] sm:$0xf]
    %v94 = vld [vmem:[%s3 + $0x3c] sm:$0xf]
    %v111 = vunpack.c.l.b16 %v79
    %v112 = vunpack.c.l.b16 %v80
    %v113 = vunpack.c.l.b16 %v81
    %v114 = vunpack.c.l.b16 %v82
    %v115 = vunpack.c.l.b16 %v83
    %v116 = vunpack.c.l.b16 %v84
    %v117 = vunpack.c.l.b16 %v85
    %v118 = vunpack.c.l.b16 %v86
    %v119 = vunpack.c.l.b16 %v87
    %v120 = vunpack.c.l.b16 %v88
    %v121 = vunpack.c.l.b16 %v89
    %v122 = vunpack.c.l.b16 %v90
    %v123 = vunpack.c.l.b16 %v91
    %v124 = vunpack.c.l.b16 %v92
    %v125 = vunpack.c.l.b16 %v93
    %v126 = vunpack.c.l.b16 %v94
    %v127 = vpack.c.b16 %v112, %v111
    %v128 = vpack.c.b16 %v114, %v113
    %v129 = vpack.c.b16 %v116, %v115
    %v130 = vpack.c.b16 %v118, %v117
    %v131 = vpack.c.b16 %v120, %v119
    %v132 = vpack.c.b16 %v122, %v121
    %v133 = vpack.c.b16 %v124, %v123
    %v134 = vpack.c.b16 %v126, %v125
    %143 = vmatpush.bf16.msra.mxu0 %v134
    %144 = vmatpush.bf16.msra.mxu0 %v133
    %145 = vmatpush.bf16.msra.mxu0 %v132
    %146 = vmatpush.bf16.msra.mxu0 %v131
    %147 = vmatpush.bf16.msra.mxu0 %v130
    %148 = vmatpush.bf16.msra.mxu0 %v129
    %149 = vmatpush.bf16.msra.mxu0 %v128
    %150 = vmatpush.bf16.msra.mxu0 %v127
    %151 = vmatmul.bf16.gmra.mxu0 %v78
    %v152 = vpop.f32.mrf.mxu0
    %v153 = vadd.f32 0.0, %v152
    %v154 = vpop.f32.mrf.mxu0
    %v155 = vadd.f32 0.0, %v154
    %156 = vdwg.mxu0
    %v157 = vadd.f32 %v76, %v153
    %v158 = vadd.f32 %v77, %v155
    %159 = vst.msk [vmem:[#allocation2] sm:$0xff] %vm56, %v157
    %160 = vst.msk [vmem:[#allocation2 + $0x8] sm:$0xff] %vm56, %v158
    // Predicated region
    $region26: #{tpu_custom_call.1} parent=1 // pred_check
      %p161 = pneg %p22
    $region27: #{tpu_custom_call.1} parent=1 // pred_check_branch
      %163 = sbr.rel (%p161) target = $region29
    $region28: #{tpu_custom_call.1} parent=1 // pred_region
      %v164 = vld [vmem:[#allocation2] sm:$0xff]
      %v165 = vld [vmem:[#allocation2 + $0x8] sm:$0xff]
      %v166 = vld [vmem:[%s4] sm:$0x1]
      %v168 = vperm.slane %v166, 0
      %v170 = vadd.f32 %v164, %v168
      %v171 = vadd.f32 %v165, %v168
      %172 = vst.msk [vmem:[#allocation2] sm:$0xff] %vm56, %v170
      %173 = vst.msk [vmem:[#allocation2 + $0x8] sm:$0xff] %vm56, %v171
    $region29: #{tpu_custom_call.1} parent=1 // pred_fallthru
      _
    // Predicated region
    $region30: #{tpu_custom_call.1} parent=1 // pred_check
      _
    $region31: #{tpu_custom_call.1} parent=1 // pred_check_branch
      %175 = sbr.rel (0) target = $region33
    $region32: #{tpu_custom_call.1} parent=1 // pred_region
      %177 = vsyncadd [#allocation3], 0
      %s178 = sshll.u32 [#allocation2], 4
      %s179 = int_to_ptr.vmem [resolvable:$true] %s178
      %s180 = sshll.u32 %s5, 4
      %s181 = int_to_ptr.hbm [resolvable:$true] %s180
      %186 = dma.vmem_to_hbm [thread:$0]  %s179, 256, %s181, [#allocation3], 128, 128, 8
    $region33: #{tpu_custom_call.1} parent=1 // pred_fallthru
      _
    // Predicated region
    $region34: #{tpu_custom_call.1} parent=1 // pred_check
      _
    $region35: #{tpu_custom_call.1} parent=1 // pred_check_branch
      %188 = sbr.rel (0) target = $region37
    $region36: #{tpu_custom_call.1} parent=1 // pred_region
      %190 = dma.done [#allocation3], 256
    $region37: #{tpu_custom_call.1} parent=1 // pred_fallthru
      _
    %191 = vsyncpa [#allocation3], 1

</llo_original>
